<compile_context>
chip_gen: v6e
topology: v6e:2x2x1
jax: 0.10.0
libtpu: 0.0.40
codegen_flags: <defaults>
</compile_context>

<pallas_src>
import numpy as np
import jax
import jax.numpy as jnp
from jax.experimental import pallas as pl
from jax.experimental.pallas import tpu as pltpu


def position_encoding_init(emb_dim, n_position=82):
    """Sinusoid position encoding table (identical math to the torch version)."""
    position_enc = np.array(
        [
            [pos / np.power(10000, 2 * (j // 2) / emb_dim) for j in range(emb_dim)]
            if pos != 0
            else np.zeros(emb_dim)
            for pos in range(n_position)
        ]
    )
    position_enc[1:, 0::2] = np.sin(position_enc[1:, 0::2])
    position_enc[1:, 1::2] = np.cos(position_enc[1:, 1::2])
    return jnp.asarray(position_enc, dtype=jnp.float32)


def _input_embedding_kernel(tok_ref, emb_ref, pe_ref, out_ref):
    # tok_ref: VMEM (Rb, 1)  int32 flattened token ids for this (batch, seq-block)
    # emb_ref: VMEM (V, Dp)  full embedding table, resident (single copy, no pipeline)
    # pe_ref : VMEM (Rb, Dp) positional-encoding rows for this seq-block
    # out_ref: VMEM (Rb, Dp) output row block (lane-dense: Dp % 128 == 0)
    Rb = out_ref.shape[0]
    V = emb_ref.shape[0]

    ids = tok_ref[...]                                          # (Rb, 1) int32
    col = jax.lax.broadcasted_iota(jnp.int32, (Rb, V), 1)       # (Rb, V) lane iota
    # One-hot gather: OOB / negative ids select nothing -> all-zero embedding row.
    onehot = (ids == col).astype(jnp.float32)                   # (Rb, V)

    # Precision.HIGHEST => the f32 one-hot selection is exact on the MXU (the
    # multi-pass bf16 decomposition reconstructs f32 table rows bit-exactly).
    # TODO(synk): for large V*Dp, cast table + one-hot to bf16 (halves VMEM,
    #             native MXU rate) and document the ~1e-3 relative tolerance.
    emb = jnp.dot(
        onehot,
        emb_ref[...],
        preferred_element_type=jnp.float32,
        precision=jax.lax.Precision.HIGHEST,
    )                                                            # (Rb, Dp)

    out_ref[...] = (emb + pe_ref[...]).astype(out_ref.dtype)     # single dense store


def input_embedding(tokens, embed_w, pe_table, *, row_block=None):
    """tokens: (B, S) int32, embed_w: (V, D) f32, pe_table: (n_position, D) f32.

    Returns embed(tokens) + pe[:S] with shape (B, S, D) float32.
    """
    B, S = tokens.shape
    V, D = embed_w.shape
    n_pos = pe_table.shape[0]
    assert S <= n_pos, f"seq_len {S} exceeds positional table rows {n_pos}"

    # Row block along the sequence axis: must divide S and be a multiple of 8
    # (sublane rule).  For realistic S prefer 256-512 rows (MXU fill, HBM roofline).
    if row_block is None:
        row_block = min(S, 512)
    assert S % row_block == 0 and row_block % 8 == 0, (
        "row_block must divide seq_len and be a multiple of 8"
    )
    n_s = S // row_block
    R = B * S

    # Pad the lane dimension up to a multiple of 128 so kernel stores are
    # lane-dense and the MXU N dimension fills a full tile.
    Dp = ((D + 127) // 128) * 128
    embed_wp = embed_w.astype(jnp.float32)
    pe_p = pe_table.astype(jnp.float32)
    if Dp != D:
        embed_wp = jnp.pad(embed_wp, ((0, 0), (0, Dp - D)))
        pe_p = jnp.pad(pe_p, ((0, 0), (0, Dp - D)))

    tok_flat = tokens.reshape(R, 1).astype(jnp.int32)

    # Explicit VMEM budget: single-buffered resident table + double-buffered
    # streamed blocks + the one-hot intermediate.  Keep it well under v7x's
    # 64 MiB per-TC VMEM.
    vmem_need = (
        V * Dp * 4                    # embedding table, resident, single copy
        + 2 * row_block * Dp * 4      # pe blocks (double-buffered)
        + 2 * row_block * Dp * 4      # out blocks (double-buffered)
        + 2 * row_block * 4           # token-id blocks
        + row_block * V * 4           # one-hot intermediate
    )
    assert vmem_need < 48 * 1024 * 1024, (
        "VMEM budget too large for the resident-table one-hot path; shrink "
        "row_block or switch to the HBM-resident DMA-gather variant"
    )
    vmem_limit_bytes = int(min(max(2 * vmem_need, 4 << 20), 64 << 20))

    out_flat = pl.pallas_call(
        _input_embedding_kernel,
        out_shape=jax.ShapeDtypeStruct((R, Dp), jnp.float32),
        grid_spec=pltpu.PrefetchScalarGridSpec(
            num_scalar_prefetch=0,
            grid=(B, n_s),
            in_specs=[
                # token ids: one (row_block, 1) block per (batch, seq-block)
                pl.BlockSpec((row_block, 1), lambda b, s: (b * n_s + s, 0)),
                # embedding table: whole array resident in VMEM, grid-invariant,
                # not routed through the double-buffered pipeline.
                pl.BlockSpec(memory_space=pltpu.MemorySpace.VMEM),
                # positional encodings: reuse the small (n_position, Dp) table,
                # indexed by the seq-block only (no B x pre-tiling / streaming).
                pl.BlockSpec((row_block, Dp), lambda b, s: (s, 0)),
            ],
            out_specs=pl.BlockSpec((row_block, Dp), lambda b, s: (b * n_s + s, 0)),
        ),
        compiler_params=pltpu.CompilerParams(
            dimension_semantics=("parallel", "parallel"),  # 2 TCs on v7x share blocks
            vmem_limit_bytes=vmem_limit_bytes,
        ),
    )(tok_flat, embed_wp, pe_p)

    return out_flat[:, :D].reshape(B, S, D)


if __name__ == "__main__":
    # Small, deterministic shapes consistent with the module.
    vocab_size, emb_dim = 32, 32
    batch, seq_len = 2, 8

    key = jax.random.PRNGKey(0)
    k_emb, k_tok = jax.random.split(key)

    # nn.Embedding(vocab_size, emb_dim, padding_idx=0): row 0 is zeros.
    embed_w = jax.random.normal(k_emb, (vocab_size, emb_dim), dtype=jnp.float32)
    embed_w = embed_w.at[0].set(0.0)

    pe_table = position_encoding_init(emb_dim)  # (82, emb_dim)

    tokens = jax.random.randint(k_tok, (batch, seq_len), 0, vocab_size, dtype=jnp.int32)

    out = input_embedding(tokens, embed_w, pe_table)
    out = jax.block_until_ready(out)

    # Pure-JAX reference: embed(x) + pe[:seq_len]
    ref = embed_w[tokens] + pe_table[:seq_len][None, :, :]
    np.testing.assert_allclose(np.asarray(out), np.asarray(ref), rtol=1e-6, atol=1e-6)

    print("KERNEL_OK")
</pallas_src>

<mosaic_0001>
module attributes {stable_mosaic.version = 11 : i64} {
  func.func @_input_embedding_kernel(%arg0: i32, %arg1: i32, %arg2: memref<8x1xi32, #tpu.memory_space<vmem>>, %arg3: memref<32x128xf32, #tpu.memory_space<vmem>>, %arg4: memref<8x128xf32, #tpu.memory_space<vmem>>, %arg5: memref<8x128xf32, #tpu.memory_space<vmem>>) attributes {dimension_semantics = [#tpu.dimension_semantics<parallel>, #tpu.dimension_semantics<parallel>], iteration_bounds = array<i64: 2, 1>, scalar_prefetch = 0 : i64, scratch_operands = 0 : i64, tpu.core_type = #tpu.core_type<tc>, window_params = [{transform_indices = @transform_0, window_bounds = array<i64: 8, 1>}, {pipeline_mode = #tpu.pipeline_mode<synchronous>, transform_indices = @transform_1, window_bounds = array<i64: 32, 128>}, {transform_indices = @transform_2, window_bounds = array<i64: 8, 128>}, {transform_indices = @transform_3, window_bounds = array<i64: 8, 128>}]} {
    %c0 = arith.constant 0 : index
    %c0_0 = arith.constant 0 : index
    %0 = vector.load %arg2[%c0, %c0_0] : memref<8x1xi32, #tpu.memory_space<vmem>>, vector<8x1xi32>
    %1 = tpu.iota {dimensions = array<i32: 1>} : vector<8x32xi32>
    %2 = vector.broadcast %0 : vector<8x1xi32> to vector<8x32xi32>
    %3 = arith.cmpi eq, %2, %1 : vector<8x32xi32>
    %4 = arith.extui %3 : vector<8x32xi1> to vector<8x32xi32>
    %5 = arith.sitofp %4 : vector<8x32xi32> to vector<8x32xf32>
    %c0_1 = arith.constant 0 : index
    %c0_2 = arith.constant 0 : index
    %6 = vector.load %arg3[%c0_1, %c0_2] : memref<32x128xf32, #tpu.memory_space<vmem>>, vector<32x128xf32>
    %cst = arith.constant dense<0.000000e+00> : vector<8x128xf32>
    %7 = tpu.matmul %5, %6, %cst {dimension_numbers = #tpu.dot_dimension_numbers<[1], [0], [0], [1], [0, 0, 1, 1], [], []>, precision = #tpu.contract_precision<fp32>} : vector<8x32xf32>, vector<32x128xf32>, vector<8x128xf32> -> vector<8x128xf32>
    %c0_3 = arith.constant 0 : index
    %c0_4 = arith.constant 0 : index
    %8 = vector.load %arg4[%c0_3, %c0_4] : memref<8x128xf32, #tpu.memory_space<vmem>>, vector<8x128xf32>
    %9 = arith.addf %7, %8 : vector<8x128xf32>
    %c0_5 = arith.constant 0 : index
    %c0_6 = arith.constant 0 : index
    %10 = vector.load %arg5[%c0_5, %c0_6] : memref<8x128xf32, #tpu.memory_space<vmem>>, vector<8x128xf32>
    tpu.vector_store %arg5[%c0_5, %c0_6], %9 {strides = array<i32>} : memref<8x128xf32, #tpu.memory_space<vmem>>, vector<8x128xf32>,
    return
  }
  func.func @transform_0(%arg0: i32, %arg1: i32) -> (i32, i32) {
    %c1_i32 = arith.constant 1 : i32
    %0 = arith.muli %arg0, %c1_i32 : i32
    %1 = arith.addi %0, %arg1 : i32
    %c0_i32 = arith.constant 0 : i32
    %c0_i32_0 = arith.constant 0 : i32
    return %1, %c0_i32 : i32, i32
  }
  func.func @transform_1(%arg0: i32, %arg1: i32) -> (i32, i32) {
    %c0_i32 = arith.constant 0 : i32
    %c0_i32_0 = arith.constant 0 : i32
    %c0_i32_1 = arith.constant 0 : i32
    return %c0_i32, %c0_i32_0 : i32, i32
  }
  func.func @transform_2(%arg0: i32, %arg1: i32) -> (i32, i32) {
    %c0_i32 = arith.constant 0 : i32
    %c0_i32_0 = arith.constant 0 : i32
    return %arg1, %c0_i32 : i32, i32
  }
  func.func @transform_3(%arg0: i32, %arg1: i32) -> (i32, i32) {
    %c1_i32 = arith.constant 1 : i32
    %0 = arith.muli %arg0, %c1_i32 : i32
    %1 = arith.addi %0, %arg1 : i32
    %c0_i32 = arith.constant 0 : i32
    %c0_i32_0 = arith.constant 0 : i32
    return %1, %c0_i32 : i32, i32
  }
}

</mosaic_0001>

<llo_original>
// kernel: tpu_custom_call.1
$region0: #{tpu_custom_call.1}
  #allocation0 [shape = 'u32[]', space=smem, size = 0x4, offset = 0x4, fixed_abs, tag = 'smem constant byte address 0x4 - core index']
  #allocation1 [shape = 'u32[144,128]{1,0:T(1,128)}', space=vmem, size = 0x12000, scoped, tag = 'internal scratch']
  %s0 = inlined_call_operand.vmem [shape: s32[16,1], index: 0, kind: input, shape index: {}]
  %s1 = inlined_call_operand.hbm [shape: f32[32,128], index: 1, kind: input, shape index: {}]
  %s2 = inlined_call_operand.hbm [shape: f32[82,128], index: 2, kind: input, shape index: {}]
  %s3 = inlined_call_operand.hbm [shape: f32[16,128], index: 3, kind: output, shape index: {}]
  %s4 = sld [smem:[#allocation0]]
  $region53: #{tpu_custom_call.1} parent=0
    _
  %s6 = ssub.s32 1, %s4
  %s7 = scalar_select 0, %s6, %s4
  $region1: #{tpu_custom_call.1} parent=0
    #allocation2 [shape = 'u8[16384]{0}', space=vmem, size = 0x4000, scoped, tag = 'input window, operand 1, single buffered']
    #allocation3 [shape = 's32[2]{0}', space=sflag, size = 0x8, scoped, tag = 'scoped memory for tpu_custom_call.1']
    #allocation4 [shape = 's32[2]{0}', space=sflag, size = 0x8, scoped, tag = 'scoped memory for tpu_custom_call.1']
    #allocation5 [shape = 'u8[4096]{0}', space=vmem, size = 0x1000, scoped, tag = 'input window, operand 2, single buffered']
    #allocation6 [shape = 's32[1]{0}', space=sflag, size = 0x4, scoped, tag = 'scoped memory for tpu_custom_call.1']
    #allocation7 [shape = 'u8[8192]{0}', space=vmem, size = 0x2000, scoped, tag = 'output window, operand 0']
    %8 = vsyncpa [#allocation3], 0
    %9 = vsyncpa [#allocation6], 0
    %10 = vsyncpa [#allocation4], 0
    %s11 = scalar_lea.sflag [#allocation4], 1
    %12 = vsyncpa %s11, 0
    loop: start=0, step=1, limit=4
    $region2: #{tpu_custom_call.1} parent=1 // loop_pre_header
      _
    $region3: #{tpu_custom_call.1} parent=1 // loop_header
      %s14 = sphi 0, %s18
      %p15 = scmp.ge.s32.totalorder %s14, 4
      %s21 = sphi 0, %s33
      %s22 = sphi 0, %s29
      %s23 = sphi 0, %s21
      %s24 = sphi 0, %s22
      %s25 = sphi 0, %s23
      %s26 = sphi 0, %s24
      %s38 = sphi 0, %s40
      %s41 = sphi 0, %s38
      %s42 = sphi 0, %s41
      %s58 = sphi 0, %s42
      %s62 = sphi 0, %s62
      %s64 = sphi 0, %s62
      %s65 = sphi 0, %s64
      %s79 = sphi 0, %s65
      %s85 = sphi 0, %s87
      %s88 = sphi 0, %s85
      %s89 = sphi 0, %s88
      %s105 = sphi 0, %s89
      %s113 = sphi 0, %s115
      %s116 = sphi 0, %s113
      %s117 = sphi 0, %s116
      %s133 = sphi 0, %s117
    $region4: #{tpu_custom_call.1} parent=1 // loop_header_branch
      %17 = sbr.rel (%p15) target = $region8
    $region5: #{tpu_custom_call.1} parent=1 // loop_body
      %s19 = ssub.s32 %s14, 1
      %s20 = ssub.s32 %s14, 2
      %s27 = sadd.s32 1, %s22
      %p28 = scmp.ge.s32.totalorder %s27, 1
      %s29 = scalar_select %p28, 0, %s27
      %s30 = sadd.s32 1, %s21
      %s31 = scalar_select %p28, %s30, %s21
      %p32 = scmp.ge.s32.totalorder %s31, 2
      %s33 = scalar_select %p32, 0, %s31
      %s34 = sadd.s32 %s21, %s22
      %s35 = sadd.s32 %s33, %s29
      %s36 = ssub.s32 %s34, %s35
      %p37 = scmp.eq.s32.totalorder %s36, 0
      %s39 = sadd.s32 %s38, 1
      %s40 = scalar_select %p37, %s38, %s39
      %p43 = pneg %p37
      %p44 = scmp.eq.s32.totalorder %s14, 1
      %p45 = por %p43, %p44
      %p46 = scmp.ne.s32.totalorder %s38, %s41
      %p47 = scmp.eq.s32.totalorder %s14, 0
      %p48 = por %p46, %p47
      %p49 = scmp.ne.s32.totalorder %s38, %s41
      %p50 = scmp.eq.s32.totalorder %s19, 1
      %p51 = por %p49, %p50
      %p52 = scmp.ne.s32.totalorder %s41, %s42
      %p53 = scmp.eq.s32.totalorder %s19, 0
      %p54 = por %p52, %p53
      %p55 = scmp.ne.s32.totalorder %s41, %s42
      %p56 = scmp.eq.s32.totalorder %s20, 1
      %p57 = por %p55, %p56
      %p59 = scmp.ne.s32.totalorder %s42, %s58
      %p60 = scmp.eq.s32.totalorder %s20, 0
      %p61 = por %p59, %p60
      %s63 = sadd.s32 %s62, 1
      %p66 = scmp.eq.s32.totalorder %s14, 1
      %p67 = scmp.ne.s32.totalorder %s62, %s64
      %p68 = scmp.eq.s32.totalorder %s14, 0
      %p69 = por %p67, %p68
      %p70 = scmp.ne.s32.totalorder %s62, %s64
      %p71 = scmp.eq.s32.totalorder %s19, 1
      %p72 = por %p70, %p71
      %p73 = scmp.ne.s32.totalorder %s64, %s65
      %p74 = scmp.eq.s32.totalorder %s19, 0
      %p75 = por %p73, %p74
      %p76 = scmp.ne.s32.totalorder %s64, %s65
      %p77 = scmp.eq.s32.totalorder %s20, 1
      %p78 = por %p76, %p77
      %p80 = scmp.ne.s32.totalorder %s65, %s79
      %p81 = scmp.eq.s32.totalorder %s20, 0
      %p82 = por %p80, %p81
      %s83 = ssub.s32 %s22, %s29
      %p84 = scmp.eq.s32.totalorder %s83, 0
      %s86 = sadd.s32 %s85, 1
      %s87 = scalar_select %p84, %s85, %s86
      %p90 = pneg %p84
      %p91 = scmp.eq.s32.totalorder %s14, 1
      %p92 = por %p90, %p91
      %p93 = scmp.ne.s32.totalorder %s85, %s88
      %p94 = scmp.eq.s32.totalorder %s14, 0
      %p95 = por %p93, %p94
      %p96 = scmp.ne.s32.totalorder %s85, %s88
      %p97 = scmp.eq.s32.totalorder %s19, 1
      %p98 = por %p96, %p97
      %p99 = scmp.ne.s32.totalorder %s88, %s89
      %p100 = scmp.eq.s32.totalorder %s19, 0
      %p101 = por %p99, %p100
      %p102 = scmp.ne.s32.totalorder %s88, %s89
      %p103 = scmp.eq.s32.totalorder %s20, 1
      %p104 = por %p102, %p103
      %p106 = scmp.ne.s32.totalorder %s89, %s105
      %p107 = scmp.eq.s32.totalorder %s20, 0
      %p108 = por %p106, %p107
      %s109 = sadd.s32 %s21, %s22
      %s110 = sadd.s32 %s33, %s29
      %s111 = ssub.s32 %s109, %s110
      %p112 = scmp.eq.s32.totalorder %s111, 0
      %s114 = sadd.s32 %s113, 1
      %s115 = scalar_select %p112, %s113, %s114
      %p118 = pneg %p112
      %p119 = scmp.eq.s32.totalorder %s14, 1
      %p120 = por %p118, %p119
      %p121 = scmp.ne.s32.totalorder %s113, %s116
      %p122 = scmp.eq.s32.totalorder %s14, 0
      %p123 = por %p121, %p122
      %p124 = scmp.ne.s32.totalorder %s113, %s116
      %p125 = scmp.eq.s32.totalorder %s19, 1
      %p126 = por %p124, %p125
      %p127 = scmp.ne.s32.totalorder %s116, %s117
      %p128 = scmp.eq.s32.totalorder %s19, 0
      %p129 = por %p127, %p128
      %p130 = scmp.ne.s32.totalorder %s116, %s117
      %p131 = scmp.eq.s32.totalorder %s20, 1
      %p132 = por %p130, %p131
      %p134 = scmp.ne.s32.totalorder %s117, %s133
      %p135 = scmp.eq.s32.totalorder %s20, 0
      %p136 = por %p134, %p135
      %p137 = scmp.le.s32.totalorder 1, %s14
      %p138 = scmp.lt.s32.totalorder %s14, 3
      %p139 = pnand %p137, %p138
      %p140 = pneg %p139
      // Predicated region
      $region9: #{tpu_custom_call.1} parent=5 // pred_check
        _
      $region10: #{tpu_custom_call.1} parent=5 // pred_check_branch
        %142 = sbr.rel (%p139) target = $region12
      $region11: #{tpu_custom_call.1} parent=5 // pred_region
        %s143 = ssub.s32 %s14, 1
        // Predicated region
        $region13: #{tpu_custom_call.1} parent=11 // pred_check
          %p144 = pneg %p75
        $region14: #{tpu_custom_call.1} parent=11 // pred_check_branch
          %146 = sbr.rel (%p144) target = $region16
        $region15: #{tpu_custom_call.1} parent=11 // pred_region
          %s148 = ssub.s32 512, 512
          %149 = vsyncadd [#allocation3], %s148
          %s150 = sshll.u32 [#allocation2], 4
          %s151 = int_to_ptr.vmem [resolvable:$true] %s150
          %156 = dma.hbm_to_vmem [thread:$0]  %s1, 512, %s151, [#allocation3], 128, 128, 8
        $region16: #{tpu_custom_call.1} parent=11 // pred_fallthru
          _
        // Predicated region
        $region17: #{tpu_custom_call.1} parent=11 // pred_check
          %p157 = pneg %p101
        $region18: #{tpu_custom_call.1} parent=11 // pred_check_branch
          %159 = sbr.rel (%p157) target = $region20
        $region19: #{tpu_custom_call.1} parent=11 // pred_region
          %s161 = ssub.s32 128, 128
          %162 = vsyncadd [#allocation6], %s161
          %s163 = smul.addr %s24, 128
          %s164 = scalar_lea.hbm %s2, %s163
          %s166 = sshll.u32 [#allocation5], 4
          %s167 = int_to_ptr.vmem [resolvable:$true] %s166
          %169 = dma.hbm_to_vmem [thread:$0]  %s164, 128, %s167, [#allocation6]
        $region20: #{tpu_custom_call.1} parent=11 // pred_fallthru
          _
      $region12: #{tpu_custom_call.1} parent=5 // pred_fallthru
        _
      %p170 = scmp.lt.s32.totalorder %s14, 2
      // Predicated region
      $region21: #{tpu_custom_call.1} parent=5 // pred_check
        %p171 = pneg %p170
      $region22: #{tpu_custom_call.1} parent=5 // pred_check_branch
        %173 = sbr.rel (%p171) target = $region24
      $region23: #{tpu_custom_call.1} parent=5 // pred_region
        // Predicated region
        $region25: #{tpu_custom_call.1} parent=23 // pred_check
          %p174 = pneg %p48
        $region26: #{tpu_custom_call.1} parent=23 // pred_check_branch
          %176 = sbr.rel (%p174) target = $region28
        $region27: #{tpu_custom_call.1} parent=23 // pred_region
          %s177 = sadd.s32 %s21, %s22
          %p178 = scmp.lt.s32.totalorder %s177, 1
          %s179 = scalar_select %p178, %s177, 1
          %s180 = smul.addr %s179, 8
          %s181 = scalar_lea.vmem %s0, %s180
          %s182 = sadd.s32 %s21, %s22
        $region28: #{tpu_custom_call.1} parent=23 // pred_fallthru
          _
      $region24: #{tpu_custom_call.1} parent=5 // pred_fallthru
        _
      %p183 = scmp.le.s32.totalorder 1, %s14
      %p184 = scmp.lt.s32.totalorder %s14, 3
      %p185 = pnand %p183, %p184
      %p186 = pneg %p185
      // Predicated region
      $region29: #{tpu_custom_call.1} parent=5 // pred_check
        _
      $region30: #{tpu_custom_call.1} parent=5 // pred_check_branch
        %188 = sbr.rel (%p185) target = $region32
      $region31: #{tpu_custom_call.1} parent=5 // pred_region
        %s189 = ssub.s32 %s14, 1
        // Predicated region
        $region33: #{tpu_custom_call.1} parent=31 // pred_check
          %p190 = pneg %p75
        $region34: #{tpu_custom_call.1} parent=31 // pred_check_branch
          %192 = sbr.rel (%p190) target = $region36
        $region35: #{tpu_custom_call.1} parent=31 // pred_region
          %193 = dma.done [#allocation3], 512
        $region36: #{tpu_custom_call.1} parent=31 // pred_fallthru
          _
        // Predicated region
        $region37: #{tpu_custom_call.1} parent=31 // pred_check
          %p194 = pneg %p101
        $region38: #{tpu_custom_call.1} parent=31 // pred_check_branch
          %196 = sbr.rel (%p194) target = $region40
        $region39: #{tpu_custom_call.1} parent=31 // pred_region
          %197 = dma.done [#allocation6], 128
        $region40: #{tpu_custom_call.1} parent=31 // pred_fallthru
          _
        %s198 = sadd.s32 %s23, %s24
        %p199 = scmp.lt.s32.totalorder %s198, 1
        %s200 = scalar_select %p199, %s198, 1
        %s201 = smul.addr %s200, 8
        %s202 = scalar_lea.vmem %s0, %s201
        %p203 = pneg %p54
        %p204 = pneg %p51
        %p205 = pneg %p75
        %p206 = pneg %p72
        %p207 = pneg %p101
        %p208 = pneg %p98
        %p209 = pneg %p129
        %p210 = pneg %p126
        %s211 = sand.u32 %s116, 1
        %s212 = scalar_lea.sflag [#allocation4], %s211
        %s213 = sand.u32 %s116, 1
        %s214 = smul.addr %s213, 8
        %s215 = scalar_lea.vmem [#allocation7], %s214
        %s216 = sadd.s32 %s23, %s24
        %p217 = scmp.lt.s32.totalorder %s216, 1
        %s218 = scalar_select %p217, %s216, 1
        %s219 = smul.addr %s218, 8
        %s220 = scalar_lea.vmem %s0, %s219
        %s221 = sadd.s32 %s23, %s24
        %s222 = sadd.s32 %s23, %s24
        %v223 = vld [vmem:[%s220] sm:$0xff]
        %v224 = vlaneseq
        %v225 = vand.u32 %v224, 127
        %226 = vset.pattern.permute.xlu0 0
        %227 = vperm.xlu0 %226, %v223
        %v228 = vpop.permute.xlu0 %227
        %vm229 = vcmp.eq.s32.totalorder %v228, %v225
        %v230 = vsel %vm229, 1, 0
        %v231 = vcvt.s32.f32 %v230
        %v232 = vld [vmem:[#allocation2] sm:$0xff]
        %v233 = vld [vmem:[#allocation2 + $0x8] sm:$0xff]
        %v234 = vld [vmem:[#allocation2 + $0x10] sm:$0xff]
        %v235 = vld [vmem:[#allocation2 + $0x18] sm:$0xff]
        %v236 = vld [vmem:[#allocation5] sm:$0xff]
        %vm237 = vcmask 261120
        %v239 = vsel %vm237, %v231, 0
        %241 = vmatprep.subr.mxu0 0.0
        %242 = vmatpush1.msra.mxu0 0.0
        %243 = vmatprep.subr.mxu0 0.0
        %244 = vmatpush1.msra.mxu0 0.0
        %245 = vmatprep.subr.mxu0 0.0
        %246 = vmatpush1.msra.mxu0 0.0
        %247 = vmatprep.subr.mxu0 0.0
        %248 = vmatpush1.msra.mxu0 0.0
        %249 = vmatprep.subr.mxu0 0.0
        %250 = vmatpush1.msra.mxu0 0.0
        %251 = vmatprep.subr.mxu0 0.0
        %252 = vmatpush1.msra.mxu0 0.0
        %253 = vmatprep.subr.mxu0 0.0
        %254 = vmatpush1.msra.mxu0 0.0
        %255 = vmatprep.subr.mxu0 0.0
        %256 = vmatpush1.msra.mxu0 0.0
        %257 = vmatprep.subr.mxu0 0.0
        %258 = vmatpush1.msra.mxu0 0.0
        %259 = vmatprep.subr.mxu0 0.0
        %260 = vmatpush1.msra.mxu0 0.0
        %261 = vmatprep.subr.mxu0 0.0
        %262 = vmatpush1.msra.mxu0 0.0
        %263 = vmatprep.subr.mxu0 0.0
        %264 = vmatpush1.msra.mxu0 0.0
        %265 = vmatprep.subr.mxu0 0.0
        %v266 = vand.u32 %v235, 4294901760
        %267 = vmatpush1.msra.mxu0 %v266
        %268 = vmatprep.subr.mxu0 0.0
        %v269 = vand.u32 %v234, 4294901760
        %270 = vmatpush1.msra.mxu0 %v269
        %271 = vmatprep.subr.mxu0 0.0
        %v272 = vand.u32 %v233, 4294901760
        %273 = vmatpush1.msra.mxu0 %v272
        %274 = vmatprep.subr.mxu0 0.0
        %v275 = vand.u32 %v232, 4294901760
        %276 = vmatpush1.msra.mxu0 %v275
        %277 = vmatprep.subr.mxu0 0.0
        %278 = vmatpush2.msra.mxu0 0.0
        %279 = vmatprep.subr.mxu0 0.0
        %280 = vmatpush2.msra.mxu0 0.0
        %281 = vmatprep.subr.mxu0 0.0
        %282 = vmatpush2.msra.mxu0 0.0
        %283 = vmatprep.subr.mxu0 0.0
        %284 = vmatpush2.msra.mxu0 0.0
        %285 = vmatprep.subr.mxu0 0.0
        %286 = vmatpush2.msra.mxu0 0.0
        %287 = vmatprep.subr.mxu0 0.0
        %288 = vmatpush2.msra.mxu0 0.0
        %289 = vmatprep.subr.mxu0 0.0
        %290 = vmatpush2.msra.mxu0 0.0
        %291 = vmatprep.subr.mxu0 0.0
        %292 = vmatpush2.msra.mxu0 0.0
        %293 = vmatprep.subr.mxu0 0.0
        %294 = vmatpush2.msra.mxu0 0.0
        %295 = vmatprep.subr.mxu0 0.0
        %296 = vmatpush2.msra.mxu0 0.0
        %297 = vmatprep.subr.mxu0 0.0
        %298 = vmatpush2.msra.mxu0 0.0
        %299 = vmatprep.subr.mxu0 0.0
        %300 = vmatpush2.msra.mxu0 0.0
        %301 = vmatprep.subr.mxu0 0.0
        %302 = vmatpush2.msra.mxu0 0.0
        %303 = vmatprep.subr.mxu0 0.0
        %304 = vmatpush2.msra.mxu0 0.0
        %305 = vmatprep.subr.mxu0 0.0
        %306 = vmatpush2.msra.mxu0 0.0
        %307 = vmatprep.subr.mxu0 0.0
        %308 = vmatpush2.msra.mxu0 0.0
        %309 = vmatprep.mubr.f32.mxu0 0.0
        %v310 = vand.u32 %v239, 4294901760
        %v311 = vsub.f32 %v239, %v310
        %v312 = vand.u32 %v311, 4294901760
        %v313 = vsub.f32 %v311, %v312
        %v314 = vand.u32 %v313, 4294901760
        %315 = vmatmul.mubr.f32.gmra.mxu0 %v314
        %v316 = vpop.f32.mrf.mxu0
        %v317 = vadd.f32 %v236, %v316
        %v318 = vpop.f32.mrf.mxu0
        %319 = vdwg.mxu0
        %320 = vmatprep.subr.mxu0 0.0
        %321 = vmatpush1.msra.mxu0 0.0
        %322 = vmatprep.subr.mxu0 0.0
        %323 = vmatpush1.msra.mxu0 0.0
        %324 = vmatprep.subr.mxu0 0.0
        %325 = vmatpush1.msra.mxu0 0.0
        %326 = vmatprep.subr.mxu0 0.0
        %327 = vmatpush1.msra.mxu0 0.0
        %328 = vmatprep.subr.mxu0 0.0
        %329 = vmatpush1.msra.mxu0 0.0
        %330 = vmatprep.subr.mxu0 0.0
        %331 = vmatpush1.msra.mxu0 0.0
        %332 = vmatprep.subr.mxu0 0.0
        %333 = vmatpush1.msra.mxu0 0.0
        %334 = vmatprep.subr.mxu0 0.0
        %335 = vmatpush1.msra.mxu0 0.0
        %336 = vmatprep.subr.mxu0 0.0
        %337 = vmatpush1.msra.mxu0 0.0
        %338 = vmatprep.subr.mxu0 0.0
        %339 = vmatpush1.msra.mxu0 0.0
        %340 = vmatprep.subr.mxu0 0.0
        %341 = vmatpush1.msra.mxu0 0.0
        %342 = vmatprep.subr.mxu0 0.0
        %343 = vmatpush1.msra.mxu0 0.0
        %344 = vmatprep.subr.mxu0 0.0
        %v345 = vand.u32 %v235, 4294901760
        %v346 = vsub.f32 %v235, %v345
        %v347 = vand.u32 %v346, 4294901760
        %v348 = vsub.f32 %v346, %v347
        %v349 = vand.u32 %v348, 4294901760
        %350 = vmatpush1.msra.mxu0 %v349
        %351 = vmatprep.subr.mxu0 0.0
        %v352 = vand.u32 %v234, 4294901760
        %v353 = vsub.f32 %v234, %v352
        %v354 = vand.u32 %v353, 4294901760
        %v355 = vsub.f32 %v353, %v354
        %v356 = vand.u32 %v355, 4294901760
        %357 = vmatpush1.msra.mxu0 %v356
        %358 = vmatprep.subr.mxu0 0.0
        %v359 = vand.u32 %v233, 4294901760
        %v360 = vsub.f32 %v233, %v359
        %v361 = vand.u32 %v360, 4294901760
        %v362 = vsub.f32 %v360, %v361
        %v363 = vand.u32 %v362, 4294901760
        %364 = vmatpush1.msra.mxu0 %v363
        %365 = vmatprep.subr.mxu0 0.0
        %v366 = vand.u32 %v232, 4294901760
        %v367 = vsub.f32 %v232, %v366
        %v368 = vand.u32 %v367, 4294901760
        %v369 = vsub.f32 %v367, %v368
        %v370 = vand.u32 %v369, 4294901760
        %371 = vmatpush1.msra.mxu0 %v370
        %372 = vmatprep.subr.mxu0 0.0
        %373 = vmatpush2.msra.mxu0 0.0
        %374 = vmatprep.subr.mxu0 0.0
        %375 = vmatpush2.msra.mxu0 0.0
        %376 = vmatprep.subr.mxu0 0.0
        %377 = vmatpush2.msra.mxu0 0.0
        %378 = vmatprep.subr.mxu0 0.0
        %379 = vmatpush2.msra.mxu0 0.0
        %380 = vmatprep.subr.mxu0 0.0
        %381 = vmatpush2.msra.mxu0 0.0
        %382 = vmatprep.subr.mxu0 0.0
        %383 = vmatpush2.msra.mxu0 0.0
        %384 = vmatprep.subr.mxu0 0.0
        %385 = vmatpush2.msra.mxu0 0.0
        %386 = vmatprep.subr.mxu0 0.0
        %387 = vmatpush2.msra.mxu0 0.0
        %388 = vmatprep.subr.mxu0 0.0
        %389 = vmatpush2.msra.mxu0 0.0
        %390 = vmatprep.subr.mxu0 0.0
        %391 = vmatpush2.msra.mxu0 0.0
        %392 = vmatprep.subr.mxu0 0.0
        %393 = vmatpush2.msra.mxu0 0.0
        %394 = vmatprep.subr.mxu0 0.0
        %395 = vmatpush2.msra.mxu0 0.0
        %396 = vmatprep.subr.mxu0 0.0
        %397 = vmatpush2.msra.mxu0 0.0
        %398 = vmatprep.subr.mxu0 0.0
        %399 = vmatpush2.msra.mxu0 0.0
        %400 = vmatprep.subr.mxu0 0.0
        %401 = vmatpush2.msra.mxu0 0.0
        %402 = vmatprep.subr.mxu0 0.0
        %403 = vmatpush2.msra.mxu0 0.0
        %404 = vmatprep.mubr.f32.mxu0 0.0
        %v405 = vand.u32 %v239, 4294901760
        %406 = vmatmul.mubr.f32.gmra.mxu0 %v405
        %v407 = vpop.f32.mrf.mxu0
        %v408 = vadd.f32 %v317, %v407
        %v409 = vpop.f32.mrf.mxu0
        %410 = vdwg.mxu0
        %411 = vmatprep.subr.mxu0 0.0
        %412 = vmatpush1.msra.mxu0 0.0
        %413 = vmatprep.subr.mxu0 0.0
        %414 = vmatpush1.msra.mxu0 0.0
        %415 = vmatprep.subr.mxu0 0.0
        %416 = vmatpush1.msra.mxu0 0.0
        %417 = vmatprep.subr.mxu0 0.0
        %418 = vmatpush1.msra.mxu0 0.0
        %419 = vmatprep.subr.mxu0 0.0
        %420 = vmatpush1.msra.mxu0 0.0
        %421 = vmatprep.subr.mxu0 0.0
        %422 = vmatpush1.msra.mxu0 0.0
        %423 = vmatprep.subr.mxu0 0.0
        %424 = vmatpush1.msra.mxu0 0.0
        %425 = vmatprep.subr.mxu0 0.0
        %426 = vmatpush1.msra.mxu0 0.0
        %427 = vmatprep.subr.mxu0 0.0
        %428 = vmatpush1.msra.mxu0 0.0
        %429 = vmatprep.subr.mxu0 0.0
        %430 = vmatpush1.msra.mxu0 0.0
        %431 = vmatprep.subr.mxu0 0.0
        %432 = vmatpush1.msra.mxu0 0.0
        %433 = vmatprep.subr.mxu0 0.0
        %434 = vmatpush1.msra.mxu0 0.0
        %435 = vmatprep.subr.mxu0 0.0
        %v436 = vand.u32 %v235, 4294901760
        %v437 = vsub.f32 %v235, %v436
        %438 = vmatpush1.msra.mxu0 %v437
        %439 = vmatprep.subr.mxu0 0.0
        %v440 = vand.u32 %v234, 4294901760
        %v441 = vsub.f32 %v234, %v440
        %442 = vmatpush1.msra.mxu0 %v441
        %443 = vmatprep.subr.mxu0 0.0
        %v444 = vand.u32 %v233, 4294901760
        %v445 = vsub.f32 %v233, %v444
        %446 = vmatpush1.msra.mxu0 %v445
        %447 = vmatprep.subr.mxu0 0.0
        %v448 = vand.u32 %v232, 4294901760
        %v449 = vsub.f32 %v232, %v448
        %450 = vmatpush1.msra.mxu0 %v449
        %451 = vmatprep.subr.mxu0 0.0
        %452 = vmatpush2.msra.mxu0 0.0
        %453 = vmatprep.subr.mxu0 0.0
        %454 = vmatpush2.msra.mxu0 0.0
        %455 = vmatprep.subr.mxu0 0.0
        %456 = vmatpush2.msra.mxu0 0.0
        %457 = vmatprep.subr.mxu0 0.0
        %458 = vmatpush2.msra.mxu0 0.0
        %459 = vmatprep.subr.mxu0 0.0
        %460 = vmatpush2.msra.mxu0 0.0
        %461 = vmatprep.subr.mxu0 0.0
        %462 = vmatpush2.msra.mxu0 0.0
        %463 = vmatprep.subr.mxu0 0.0
        %464 = vmatpush2.msra.mxu0 0.0
        %465 = vmatprep.subr.mxu0 0.0
        %466 = vmatpush2.msra.mxu0 0.0
        %467 = vmatprep.subr.mxu0 0.0
        %468 = vmatpush2.msra.mxu0 0.0
        %469 = vmatprep.subr.mxu0 0.0
        %470 = vmatpush2.msra.mxu0 0.0
        %471 = vmatprep.subr.mxu0 0.0
        %472 = vmatpush2.msra.mxu0 0.0
        %473 = vmatprep.subr.mxu0 0.0
        %474 = vmatpush2.msra.mxu0 0.0
        %475 = vmatprep.subr.mxu0 0.0
        %476 = vmatpush2.msra.mxu0 0.0
        %477 = vmatprep.subr.mxu0 0.0
        %478 = vmatpush2.msra.mxu0 0.0
        %479 = vmatprep.subr.mxu0 0.0
        %480 = vmatpush2.msra.mxu0 0.0
        %481 = vmatprep.subr.mxu0 0.0
        %482 = vmatpush2.msra.mxu0 0.0
        %483 = vmatprep.mubr.f32.mxu0 0.0
        %v484 = vand.u32 %v239, 4294901760
        %v485 = vsub.f32 %v239, %v484
        %486 = vmatmul.mubr.f32.gmra.mxu0 %v485
        %v487 = vpop.f32.mrf.mxu0
        %v488 = vadd.f32 %v408, %v487
        %v489 = vpop.f32.mrf.mxu0
        %490 = vdwg.mxu0
        %491 = vmatprep.subr.mxu0 0.0
        %492 = vmatpush1.msra.mxu0 0.0
        %493 = vmatprep.subr.mxu0 0.0
        %494 = vmatpush1.msra.mxu0 0.0
        %495 = vmatprep.subr.mxu0 0.0
        %496 = vmatpush1.msra.mxu0 0.0
        %497 = vmatprep.subr.mxu0 0.0
        %498 = vmatpush1.msra.mxu0 0.0
        %499 = vmatprep.subr.mxu0 0.0
        %500 = vmatpush1.msra.mxu0 0.0
        %501 = vmatprep.subr.mxu0 0.0
        %502 = vmatpush1.msra.mxu0 0.0
        %503 = vmatprep.subr.mxu0 0.0
        %504 = vmatpush1.msra.mxu0 0.0
        %505 = vmatprep.subr.mxu0 0.0
        %506 = vmatpush1.msra.mxu0 0.0
        %507 = vmatprep.subr.mxu0 0.0
        %508 = vmatpush1.msra.mxu0 0.0
        %509 = vmatprep.subr.mxu0 0.0
        %510 = vmatpush1.msra.mxu0 0.0
        %511 = vmatprep.subr.mxu0 0.0
        %512 = vmatpush1.msra.mxu0 0.0
        %513 = vmatprep.subr.mxu0 0.0
        %514 = vmatpush1.msra.mxu0 0.0
        %515 = vmatprep.subr.mxu0 0.0
        %v516 = vand.u32 %v235, 4294901760
        %517 = vmatpush1.msra.mxu0 %v516
        %518 = vmatprep.subr.mxu0 0.0
        %v519 = vand.u32 %v234, 4294901760
        %520 = vmatpush1.msra.mxu0 %v519
        %521 = vmatprep.subr.mxu0 0.0
        %v522 = vand.u32 %v233, 4294901760
        %523 = vmatpush1.msra.mxu0 %v522
        %524 = vmatprep.subr.mxu0 0.0
        %v525 = vand.u32 %v232, 4294901760
        %526 = vmatpush1.msra.mxu0 %v525
        %527 = vmatprep.subr.mxu0 0.0
        %528 = vmatpush2.msra.mxu0 0.0
        %529 = vmatprep.subr.mxu0 0.0
        %530 = vmatpush2.msra.mxu0 0.0
        %531 = vmatprep.subr.mxu0 0.0
        %532 = vmatpush2.msra.mxu0 0.0
        %533 = vmatprep.subr.mxu0 0.0
        %534 = vmatpush2.msra.mxu0 0.0
        %535 = vmatprep.subr.mxu0 0.0
        %536 = vmatpush2.msra.mxu0 0.0
        %537 = vmatprep.subr.mxu0 0.0
        %538 = vmatpush2.msra.mxu0 0.0
        %539 = vmatprep.subr.mxu0 0.0
        %540 = vmatpush2.msra.mxu0 0.0
        %541 = vmatprep.subr.mxu0 0.0
        %542 = vmatpush2.msra.mxu0 0.0
        %543 = vmatprep.subr.mxu0 0.0
        %544 = vmatpush2.msra.mxu0 0.0
        %545 = vmatprep.subr.mxu0 0.0
        %546 = vmatpush2.msra.mxu0 0.0
        %547 = vmatprep.subr.mxu0 0.0
        %548 = vmatpush2.msra.mxu0 0.0
        %549 = vmatprep.subr.mxu0 0.0
        %550 = vmatpush2.msra.mxu0 0.0
        %551 = vmatprep.subr.mxu0 0.0
        %552 = vmatpush2.msra.mxu0 0.0
        %553 = vmatprep.subr.mxu0 0.0
        %554 = vmatpush2.msra.mxu0 0.0
        %555 = vmatprep.subr.mxu0 0.0
        %556 = vmatpush2.msra.mxu0 0.0
        %557 = vmatprep.subr.mxu0 0.0
        %558 = vmatpush2.msra.mxu0 0.0
        %559 = vmatprep.mubr.f32.mxu0 0.0
        %v560 = vand.u32 %v239, 4294901760
        %v561 = vsub.f32 %v239, %v560
        %v562 = vand.u32 %v561, 4294901760
        %563 = vmatmul.mubr.f32.gmra.mxu0 %v562
        %v564 = vpop.f32.mrf.mxu0
        %v565 = vadd.f32 %v488, %v564
        %v566 = vpop.f32.mrf.mxu0
        %567 = vdwg.mxu0
        %568 = vmatprep.subr.mxu0 0.0
        %569 = vmatpush1.msra.mxu0 0.0
        %570 = vmatprep.subr.mxu0 0.0
        %571 = vmatpush1.msra.mxu0 0.0
        %572 = vmatprep.subr.mxu0 0.0
        %573 = vmatpush1.msra.mxu0 0.0
        %574 = vmatprep.subr.mxu0 0.0
        %575 = vmatpush1.msra.mxu0 0.0
        %576 = vmatprep.subr.mxu0 0.0
        %577 = vmatpush1.msra.mxu0 0.0
        %578 = vmatprep.subr.mxu0 0.0
        %579 = vmatpush1.msra.mxu0 0.0
        %580 = vmatprep.subr.mxu0 0.0
        %581 = vmatpush1.msra.mxu0 0.0
        %582 = vmatprep.subr.mxu0 0.0
        %583 = vmatpush1.msra.mxu0 0.0
        %584 = vmatprep.subr.mxu0 0.0
        %585 = vmatpush1.msra.mxu0 0.0
        %586 = vmatprep.subr.mxu0 0.0
        %587 = vmatpush1.msra.mxu0 0.0
        %588 = vmatprep.subr.mxu0 0.0
        %589 = vmatpush1.msra.mxu0 0.0
        %590 = vmatprep.subr.mxu0 0.0
        %591 = vmatpush1.msra.mxu0 0.0
        %592 = vmatprep.subr.mxu0 0.0
        %v593 = vand.u32 %v235, 4294901760
        %v594 = vsub.f32 %v235, %v593
        %v595 = vand.u32 %v594, 4294901760
        %596 = vmatpush1.msra.mxu0 %v595
        %597 = vmatprep.subr.mxu0 0.0
        %v598 = vand.u32 %v234, 4294901760
        %v599 = vsub.f32 %v234, %v598
        %v600 = vand.u32 %v599, 4294901760
        %601 = vmatpush1.msra.mxu0 %v600
        %602 = vmatprep.subr.mxu0 0.0
        %v603 = vand.u32 %v233, 4294901760
        %v604 = vsub.f32 %v233, %v603
        %v605 = vand.u32 %v604, 4294901760
        %606 = vmatpush1.msra.mxu0 %v605
        %607 = vmatprep.subr.mxu0 0.0
        %v608 = vand.u32 %v232, 4294901760
        %v609 = vsub.f32 %v232, %v608
        %v610 = vand.u32 %v609, 4294901760
        %611 = vmatpush1.msra.mxu0 %v610
        %612 = vmatprep.subr.mxu0 0.0
        %613 = vmatpush2.msra.mxu0 0.0
        %614 = vmatprep.subr.mxu0 0.0
        %615 = vmatpush2.msra.mxu0 0.0
        %616 = vmatprep.subr.mxu0 0.0
        %617 = vmatpush2.msra.mxu0 0.0
        %618 = vmatprep.subr.mxu0 0.0
        %619 = vmatpush2.msra.mxu0 0.0
        %620 = vmatprep.subr.mxu0 0.0
        %621 = vmatpush2.msra.mxu0 0.0
        %622 = vmatprep.subr.mxu0 0.0
        %623 = vmatpush2.msra.mxu0 0.0
        %624 = vmatprep.subr.mxu0 0.0
        %625 = vmatpush2.msra.mxu0 0.0
        %626 = vmatprep.subr.mxu0 0.0
        %627 = vmatpush2.msra.mxu0 0.0
        %628 = vmatprep.subr.mxu0 0.0
        %629 = vmatpush2.msra.mxu0 0.0
        %630 = vmatprep.subr.mxu0 0.0
        %631 = vmatpush2.msra.mxu0 0.0
        %632 = vmatprep.subr.mxu0 0.0
        %633 = vmatpush2.msra.mxu0 0.0
        %634 = vmatprep.subr.mxu0 0.0
        %635 = vmatpush2.msra.mxu0 0.0
        %636 = vmatprep.subr.mxu0 0.0
        %637 = vmatpush2.msra.mxu0 0.0
        %638 = vmatprep.subr.mxu0 0.0
        %639 = vmatpush2.msra.mxu0 0.0
        %640 = vmatprep.subr.mxu0 0.0
        %641 = vmatpush2.msra.mxu0 0.0
        %642 = vmatprep.subr.mxu0 0.0
        %643 = vmatpush2.msra.mxu0 0.0
        %644 = vmatprep.mubr.f32.mxu0 0.0
        %v645 = vand.u32 %v239, 4294901760
        %646 = vmatmul.mubr.f32.gmra.mxu0 %v645
        %v647 = vpop.f32.mrf.mxu0
        %v648 = vadd.f32 %v565, %v647
        %v649 = vpop.f32.mrf.mxu0
        %650 = vdwg.mxu0
        %651 = vmatprep.subr.mxu0 0.0
        %652 = vmatpush1.msra.mxu0 0.0
        %653 = vmatprep.subr.mxu0 0.0
        %654 = vmatpush1.msra.mxu0 0.0
        %655 = vmatprep.subr.mxu0 0.0
        %656 = vmatpush1.msra.mxu0 0.0
        %657 = vmatprep.subr.mxu0 0.0
        %658 = vmatpush1.msra.mxu0 0.0
        %659 = vmatprep.subr.mxu0 0.0
        %660 = vmatpush1.msra.mxu0 0.0
        %661 = vmatprep.subr.mxu0 0.0
        %662 = vmatpush1.msra.mxu0 0.0
        %663 = vmatprep.subr.mxu0 0.0
        %664 = vmatpush1.msra.mxu0 0.0
        %665 = vmatprep.subr.mxu0 0.0
        %666 = vmatpush1.msra.mxu0 0.0
        %667 = vmatprep.subr.mxu0 0.0
        %668 = vmatpush1.msra.mxu0 0.0
        %669 = vmatprep.subr.mxu0 0.0
        %670 = vmatpush1.msra.mxu0 0.0
        %671 = vmatprep.subr.mxu0 0.0
        %672 = vmatpush1.msra.mxu0 0.0
        %673 = vmatprep.subr.mxu0 0.0
        %674 = vmatpush1.msra.mxu0 0.0
        %675 = vmatprep.subr.mxu0 0.0
        %v676 = vand.u32 %v235, 4294901760
        %677 = vmatpush1.msra.mxu0 %v676
        %678 = vmatprep.subr.mxu0 0.0
        %v679 = vand.u32 %v234, 4294901760
        %680 = vmatpush1.msra.mxu0 %v679
        %681 = vmatprep.subr.mxu0 0.0
        %v682 = vand.u32 %v233, 4294901760
        %683 = vmatpush1.msra.mxu0 %v682
        %684 = vmatprep.subr.mxu0 0.0
        %v685 = vand.u32 %v232, 4294901760
        %686 = vmatpush1.msra.mxu0 %v685
        %687 = vmatprep.subr.mxu0 0.0
        %688 = vmatpush2.msra.mxu0 0.0
        %689 = vmatprep.subr.mxu0 0.0
        %690 = vmatpush2.msra.mxu0 0.0
        %691 = vmatprep.subr.mxu0 0.0
        %692 = vmatpush2.msra.mxu0 0.0
        %693 = vmatprep.subr.mxu0 0.0
        %694 = vmatpush2.msra.mxu0 0.0
        %695 = vmatprep.subr.mxu0 0.0
        %696 = vmatpush2.msra.mxu0 0.0
        %697 = vmatprep.subr.mxu0 0.0
        %698 = vmatpush2.msra.mxu0 0.0
        %699 = vmatprep.subr.mxu0 0.0
        %700 = vmatpush2.msra.mxu0 0.0
        %701 = vmatprep.subr.mxu0 0.0
        %702 = vmatpush2.msra.mxu0 0.0
        %703 = vmatprep.subr.mxu0 0.0
        %704 = vmatpush2.msra.mxu0 0.0
        %705 = vmatprep.subr.mxu0 0.0
        %706 = vmatpush2.msra.mxu0 0.0
        %707 = vmatprep.subr.mxu0 0.0
        %708 = vmatpush2.msra.mxu0 0.0
        %709 = vmatprep.subr.mxu0 0.0
        %710 = vmatpush2.msra.mxu0 0.0
        %711 = vmatprep.subr.mxu0 0.0
        %712 = vmatpush2.msra.mxu0 0.0
        %713 = vmatprep.subr.mxu0 0.0
        %714 = vmatpush2.msra.mxu0 0.0
        %715 = vmatprep.subr.mxu0 0.0
        %716 = vmatpush2.msra.mxu0 0.0
        %717 = vmatprep.subr.mxu0 0.0
        %718 = vmatpush2.msra.mxu0 0.0
        %719 = vmatprep.mubr.f32.mxu0 0.0
        %v720 = vand.u32 %v239, 4294901760
        %721 = vmatmul.mubr.f32.gmra.mxu0 %v720
        %v722 = vpop.f32.mrf.mxu0
        %v723 = vadd.f32 %v648, %v722
        %v724 = vpop.f32.mrf.mxu0
        %725 = vdwg.mxu0
        %726 = vst [vmem:[%s215] sm:$0xff] %v723
        %s727 = sand.u32 %s116, 1
        %s728 = scalar_lea.sflag [#allocation4], %s727
        %s729 = sand.u32 %s116, 1
        %s730 = smul.addr %s729, 8
        %s731 = scalar_lea.vmem [#allocation7], %s730
        // Predicated region
        $region41: #{tpu_custom_call.1} parent=31 // pred_check
          %p732 = pneg %p126
        $region42: #{tpu_custom_call.1} parent=31 // pred_check_branch
          %734 = sbr.rel (%p732) target = $region44
        $region43: #{tpu_custom_call.1} parent=31 // pred_region
          %s735 = sadd.s32 %s23, %s24
          %s737 = ssub.s32 128, 128
          %738 = vsyncadd %s728, %s737
          %s739 = smul.addr %s735, 128
          %s740 = scalar_lea.hbm %s3, %s739
          %s742 = sshll.u32 %s731, 4
          %s743 = int_to_ptr.vmem [resolvable:$true] %s742
          %745 = dma.vmem_to_hbm [thread:$0]  %s743, 128, %s740, %s728
        $region44: #{tpu_custom_call.1} parent=31 // pred_fallthru
          _
      $region32: #{tpu_custom_call.1} parent=5 // pred_fallthru
        _
      %p746 = scmp.le.s32.totalorder 2, %s14
      // Predicated region
      $region45: #{tpu_custom_call.1} parent=5 // pred_check
        %p747 = pneg %p746
      $region46: #{tpu_custom_call.1} parent=5 // pred_check_branch
        %749 = sbr.rel (%p747) target = $region48
      $region47: #{tpu_custom_call.1} parent=5 // pred_region
        %s750 = ssub.s32 %s14, 2
        // Predicated region
        $region49: #{tpu_custom_call.1} parent=47 // pred_check
          %p751 = pneg %p132
        $region50: #{tpu_custom_call.1} parent=47 // pred_check_branch
          %753 = sbr.rel (%p751) target = $region52
        $region51: #{tpu_custom_call.1} parent=47 // pred_region
          %s754 = sand.u32 %s117, 1
          %s755 = scalar_lea.sflag [#allocation4], %s754
          %s756 = sand.u32 %s117, 1
          %s757 = smul.addr %s756, 8
          %s758 = scalar_lea.vmem [#allocation7], %s757
          %759 = dma.done %s755, 128
        $region52: #{tpu_custom_call.1} parent=47 // pred_fallthru
          _
      $region48: #{tpu_custom_call.1} parent=5 // pred_fallthru
        _
    $region6: #{tpu_custom_call.1} parent=1 // loop_footer
      %s18 = sadd.s32 1, %s14
    $region7: #{tpu_custom_call.1} parent=1 // loop_footer_branch
      %13 = sbr.rel target = $region3
    $region8: #{tpu_custom_call.1} parent=1 // loop_exit
      _
    %760 = vsyncpa [#allocation3], 1
    %s761 = scalar_lea.sflag [#allocation3], 1
    %762 = vsyncpa %s761, 1
    %763 = vsyncpa [#allocation6], 1
    %764 = vsyncpa [#allocation4], 1
    %s765 = scalar_lea.sflag [#allocation4], 1
    %766 = vsyncpa %s765, 1

</llo_original>
